<compile_context>
chip_gen: v6e
topology: v6e:2x2x1
jax: 0.10.0
libtpu: 0.0.40
codegen_flags: <defaults>
</compile_context>

<pallas_src>
import numpy as np
import jax
import jax.numpy as jnp
from jax.experimental import pallas as pl
from jax.experimental.pallas import tpu as pltpu


def _round_up(x, m):
    return ((x + m - 1) // m) * m


def _linear_interp_matrices(t_in: int, t_out: int):
    """(t_out, t_in) weights matching F.interpolate(mode='linear', align_corners=False)
    plus the 0/1 tap-indicator matrix M (PyTorch computes w0*x[i0]+w1*x[i1], so a NaN
    tap taints the output frame even when its weight is 0)."""
    scale = t_in / t_out
    i = np.arange(t_out)
    src = np.maximum((i + 0.5) * scale - 0.5, 0.0)
    i0 = np.minimum(np.floor(src).astype(np.int64), t_in - 1)
    lam = (src - i0).astype(np.float32)
    i1 = np.minimum(i0 + 1, t_in - 1)
    W = np.zeros((t_out, t_in), np.float32)
    M = np.zeros((t_out, t_in), np.float32)
    W[i, i0] += 1.0 - lam
    W[i, i1] += lam
    M[i, i0] = 1.0
    M[i, i1] = 1.0
    return W, M


def _crop_pad_matrices(t_in: int, t_out: int):
    """Selection matrix for the interpolate=False branch (crop to t_out, zero-pad)."""
    W = np.zeros((t_out, t_in), np.float32)
    n = min(t_in, t_out)
    W[np.arange(n), np.arange(n)] = 1.0
    return W, W.copy()


def _transform_kernel(x_ref, w_ref, m_ref, rowsum_ref, mean_s_ref, inv_std_ref,
                      o_ref, acc_ref, taint_ref):
    k = pl.program_id(2)

    @pl.when(k == 0)
    def _():
        acc_ref[...] = jnp.zeros_like(acc_ref)
        taint_ref[...] = jnp.zeros_like(taint_ref)

    x = x_ref[...]                                      # (tT, tKC) raw selected coords
    nan_mask = jnp.isnan(x)
    v = jnp.where(nan_mask, 0.0, x)

    # interpolation / crop+pad as an f32 MXU matmul, accumulated over T tiles
    acc_ref[...] += jnp.dot(w_ref[...], v, preferred_element_type=jnp.float32)
    # NaN-taint matmul in bf16 (operands are exactly 0/1 -> exact with f32 accumulation)
    taint_ref[...] += jnp.dot(m_ref[...], nan_mask.astype(jnp.bfloat16),
                              preferred_element_type=jnp.float32)

    @pl.when(k == pl.num_programs(2) - 1)
    def _():
        # folded normalization: W @ ((x-mean)*s) == (W @ x)*s - rowsum(W)*mean*s
        out = acc_ref[...] * inv_std_ref[...] - rowsum_ref[...] * mean_s_ref[...]
        # frames whose taps touched a NaN input are NaN in PyTorch -> zeroed
        o_ref[...] = jnp.where(taint_ref[...] > 0.0, 0.0, out)


class DataTransformPallas:
    def __init__(self, frame_len, keypoints, mean=None, std=None,
                 interpolate=True, interpolate_mode="linear"):
        self.frame_len = int(frame_len)
        self.keypoints = np.asarray(keypoints, dtype=np.int32)
        self.mean = np.asarray(
            (0.471518, 0.460818, -0.045338) if mean is None else mean, np.float32)
        self.std = np.asarray(
            (0.103356, 0.240428, 0.30228) if std is None else std, np.float32)
        self.interpolate = interpolate
        if interpolate and interpolate_mode != "linear":
            # TODO(synk): only 'linear' interpolation is implemented (module default).
            raise NotImplementedError("only interpolate_mode='linear' is supported")
        self._fn_cache = {}

    def __call__(self, x):
        x = jnp.asarray(x, jnp.float32)
        # TODO(synk): in a real data pipeline, bucket/pad T to a small fixed set of
        # lengths so this per-shape trace/compile cache stays small.
        return self._get_fn(tuple(x.shape))(x)

    def _get_fn(self, shape):
        if shape in self._fn_cache:
            return self._fn_cache[shape]

        T, _, C = shape
        K = int(self.keypoints.shape[0])
        F = self.frame_len
        kc = K * C

        # ---- host-side interpolation constants --------------------------------
        if self.interpolate:
            W_s, M_s = _linear_interp_matrices(T, F)
        else:
            W_s, M_s = _crop_pad_matrices(T, F)

        # ---- tiling: lane-dense K*C axis, (8,128)-legal tiles ------------------
        kcp = _round_up(max(kc, 1), 128)
        tile_kc = min(kcp, 512)
        kcp = _round_up(kcp, tile_kc)

        f_pad8 = _round_up(F, 8)
        tile_f = min(f_pad8, 256)                       # 256 is 8/16-aligned (bf16 M ok)
        f_pad = _round_up(F, tile_f)

        t_pad8 = _round_up(T, 8)
        if t_pad8 <= 512:
            tile_t, t_pad = t_pad8, t_pad8              # single T step: tile == full dim
        else:
            tile_t, t_pad = 512, _round_up(T, 512)      # multiple of 128: legal W/M tile

        W = np.zeros((f_pad, t_pad), np.float32)
        M = np.zeros((f_pad, t_pad), np.float32)
        W[:F, :T] = W_s
        M[:F, :T] = M_s
        rowsum = W.sum(axis=1, keepdims=True).astype(np.float32)        # (f_pad, 1)

        inv_std3 = (1.0 / self.std).astype(np.float32)
        inv_std_row = np.ones((1, kcp), np.float32)
        inv_std_row[0, :kc] = np.tile(inv_std3, K)
        mean_s_row = np.zeros((1, kcp), np.float32)
        mean_s_row[0, :kc] = np.tile(self.mean * inv_std3, K)

        W_j = jnp.asarray(W)
        M_j = jnp.asarray(M, jnp.bfloat16)
        rowsum_j = jnp.asarray(rowsum)
        inv_std_j = jnp.asarray(inv_std_row)
        mean_s_j = jnp.asarray(mean_s_row)
        kp_j = jnp.asarray(self.keypoints)

        grid = (f_pad // tile_f, kcp // tile_kc, t_pad // tile_t)

        # explicit VMEM budget (inputs/outputs double-buffered + 2 scratch tiles),
        # with headroom, kept well under v7x's 64 MiB physical VMEM.
        vmem_need = (2 * (tile_t * tile_kc * 4 + tile_f * tile_t * 4
                          + tile_f * tile_t * 2 + tile_f * 4 + 2 * tile_kc * 4)
                     + 2 * tile_f * tile_kc * 4
                     + 2 * tile_f * tile_kc * 4)
        vmem_limit = int(min(max(4 * vmem_need, 8 << 20), 48 << 20))

        grid_spec = pltpu.PrefetchScalarGridSpec(
            num_scalar_prefetch=0,
            grid=grid,
            in_specs=[
                pl.BlockSpec((tile_t, tile_kc), lambda i, j, k: (k, j)),   # x2d
                pl.BlockSpec((tile_f, tile_t), lambda i, j, k: (i, k)),    # W
                pl.BlockSpec((tile_f, tile_t), lambda i, j, k: (i, k)),    # M (bf16)
                pl.BlockSpec((tile_f, 1), lambda i, j, k: (i, 0)),         # rowsum(W)
                pl.BlockSpec((1, tile_kc), lambda i, j, k: (0, j)),        # mean*inv_std
                pl.BlockSpec((1, tile_kc), lambda i, j, k: (0, j)),        # inv_std
            ],
            out_specs=pl.BlockSpec((tile_f, tile_kc), lambda i, j, k: (i, j)),
            scratch_shapes=[pltpu.VMEM((tile_f, tile_kc), jnp.float32),    # acc
                            pltpu.VMEM((tile_f, tile_kc), jnp.float32)],   # taint
        )

        call = pl.pallas_call(
            _transform_kernel,
            out_shape=jax.ShapeDtypeStruct((f_pad, kcp), jnp.float32),
            grid_spec=grid_spec,
            compiler_params=pltpu.CompilerParams(
                dimension_semantics=("parallel", "parallel", "arbitrary"),
                vmem_limit_bytes=vmem_limit,
            ),
        )

        def fn(x):
            # gather + flatten + zero-pad fuse into a single producer for the kernel feed
            xs = jnp.take(x, kp_j, axis=1)                         # (T, K, C)
            x2d = xs.reshape(T, kc)
            x2d = jnp.pad(x2d, ((0, t_pad - T), (0, kcp - kc)))    # (t_pad, kcp)
            out = call(x2d, W_j, M_j, rowsum_j, mean_s_j, inv_std_j)
            return out[:F, :kc].reshape(1, F, K, C)                # matches unsqueeze(0)

        fn = jax.jit(fn)
        self._fn_cache[shape] = fn
        return fn


if __name__ == "__main__":
    key = jax.random.PRNGKey(0)
    T, K_total, C = 12, 10, 3
    frame_len = 8
    keypoints = [0, 2, 4, 7]

    x = jax.random.normal(key, (T, K_total, C), dtype=jnp.float32)
    x = x.at[3, 2, 1].set(jnp.nan)                     # exercise the NaN-zeroing path

    transform = DataTransformPallas(frame_len=frame_len, keypoints=keypoints)
    out = jax.block_until_ready(transform(x))

    assert out.shape == (1, frame_len, len(keypoints), C), out.shape
    assert out.dtype == jnp.float32
    assert bool(jnp.all(jnp.isfinite(out)))

    # pure-JAX reference mirroring the PyTorch module (taps + 0*NaN propagation)
    mean = jnp.asarray(transform.mean)
    std = jnp.asarray(transform.std)
    xs = x[:, jnp.asarray(keypoints), :]
    xn = (xs - mean) / std
    scale = T / frame_len
    src = np.maximum((np.arange(frame_len) + 0.5) * scale - 0.5, 0.0)
    i0 = np.minimum(np.floor(src).astype(np.int64), T - 1)
    lam = jnp.asarray((src - i0).astype(np.float32))[:, None, None]
    i1 = np.minimum(i0 + 1, T - 1)
    ref = (1.0 - lam) * xn[i0] + lam * xn[i1]
    ref = jnp.where(jnp.isnan(ref), 0.0, ref)[None]

    np.testing.assert_allclose(np.asarray(out), np.asarray(ref), rtol=2e-2, atol=2e-2)
    print("KERNEL_OK")
</pallas_src>

<mosaic_0001>
module attributes {stable_mosaic.version = 11 : i64} {
  func.func @_transform_kernel(%arg0: i32, %arg1: i32, %arg2: i32, %arg3: memref<16x128xf32, #tpu.memory_space<vmem>>, %arg4: memref<8x16xf32, #tpu.memory_space<vmem>>, %arg5: memref<8x16xbf16, #tpu.memory_space<vmem>>, %arg6: memref<8x1xf32, #tpu.memory_space<vmem>>, %arg7: memref<1x128xf32, #tpu.memory_space<vmem>>, %arg8: memref<1x128xf32, #tpu.memory_space<vmem>>, %arg9: memref<8x128xf32, #tpu.memory_space<vmem>>, %arg10: memref<8x128xf32, #tpu.memory_space<vmem>>, %arg11: memref<8x128xf32, #tpu.memory_space<vmem>>) attributes {dimension_semantics = [#tpu.dimension_semantics<parallel>, #tpu.dimension_semantics<parallel>, #tpu.dimension_semantics<arbitrary>], iteration_bounds = array<i64: 1, 1, 1>, scalar_prefetch = 0 : i64, scratch_operands = 2 : i64, tpu.core_type = #tpu.core_type<tc>, window_params = [{transform_indices = @transform_0, window_bounds = array<i64: 16, 128>}, {transform_indices = @transform_1, window_bounds = array<i64: 8, 16>}, {transform_indices = @transform_2, window_bounds = array<i64: 8, 16>}, {transform_indices = @transform_3, window_bounds = array<i64: 8, 1>}, {transform_indices = @transform_4, window_bounds = array<i64: 1, 128>}, {transform_indices = @transform_5, window_bounds = array<i64: 1, 128>}, {transform_indices = @transform_6, window_bounds = array<i64: 8, 128>}]} {
    %c0_i32 = arith.constant 0 : i32
    %0 = arith.cmpi eq, %arg2, %c0_i32 : i32
    %1 = arith.extui %0 : i1 to i32
    %c0_i32_0 = arith.constant 0 : i32
    %2 = arith.cmpi ne, %1, %c0_i32_0 : i32
    scf.if %2 {
      %cst_18 = arith.constant 0.000000e+00 : f32
      %23 = vector.broadcast %cst_18 : f32 to vector<8x128xf32>
      %c0_19 = arith.constant 0 : index
      %c0_20 = arith.constant 0 : index
      %24 = vector.load %arg10[%c0_19, %c0_20] : memref<8x128xf32, #tpu.memory_space<vmem>>, vector<8x128xf32>
      tpu.vector_store %arg10[%c0_19, %c0_20], %23 {strides = array<i32>} : memref<8x128xf32, #tpu.memory_space<vmem>>, vector<8x128xf32>,
      %cst_21 = arith.constant 0.000000e+00 : f32
      %25 = vector.broadcast %cst_21 : f32 to vector<8x128xf32>
      %c0_22 = arith.constant 0 : index
      %c0_23 = arith.constant 0 : index
      %26 = vector.load %arg11[%c0_22, %c0_23] : memref<8x128xf32, #tpu.memory_space<vmem>>, vector<8x128xf32>
      tpu.vector_store %arg11[%c0_22, %c0_23], %25 {strides = array<i32>} : memref<8x128xf32, #tpu.memory_space<vmem>>, vector<8x128xf32>,
    } else {
    }
    %c0 = arith.constant 0 : index
    %c0_1 = arith.constant 0 : index
    %3 = vector.load %arg3[%c0, %c0_1] : memref<16x128xf32, #tpu.memory_space<vmem>>, vector<16x128xf32>
    %4 = arith.cmpf one, %3, %3 : vector<16x128xf32>
    %cst = arith.constant 0.000000e+00 : f32
    %5 = vector.broadcast %cst : f32 to vector<16x128xf32>
    %6 = arith.select %4, %5, %3 : vector<16x128xi1>, vector<16x128xf32>
    %c0_2 = arith.constant 0 : index
    %c0_3 = arith.constant 0 : index
    %7 = vector.load %arg10[%c0_2, %c0_3] : memref<8x128xf32, #tpu.memory_space<vmem>>, vector<8x128xf32>
    %c0_4 = arith.constant 0 : index
    %c0_5 = arith.constant 0 : index
    %8 = vector.load %arg4[%c0_4, %c0_5] : memref<8x16xf32, #tpu.memory_space<vmem>>, vector<8x16xf32>
    %cst_6 = arith.constant dense<0.000000e+00> : vector<8x128xf32>
    %9 = tpu.matmul %8, %6, %cst_6 {dimension_numbers = #tpu.dot_dimension_numbers<[1], [0], [0], [1], [0, 0, 1, 1], [], []>} : vector<8x16xf32>, vector<16x128xf32>, vector<8x128xf32> -> vector<8x128xf32>
    %10 = arith.addf %7, %9 : vector<8x128xf32>
    %c0_7 = arith.constant 0 : index
    %c0_8 = arith.constant 0 : index
    %11 = vector.load %arg10[%c0_7, %c0_8] : memref<8x128xf32, #tpu.memory_space<vmem>>, vector<8x128xf32>
    tpu.vector_store %arg10[%c0_7, %c0_8], %10 {strides = array<i32>} : memref<8x128xf32, #tpu.memory_space<vmem>>, vector<8x128xf32>,
    %c0_9 = arith.constant 0 : index
    %c0_10 = arith.constant 0 : index
    %12 = vector.load %arg11[%c0_9, %c0_10] : memref<8x128xf32, #tpu.memory_space<vmem>>, vector<8x128xf32>
    %c0_11 = arith.constant 0 : index
    %c0_12 = arith.constant 0 : index
    %13 = vector.load %arg5[%c0_11, %c0_12] : memref<8x16xbf16, #tpu.memory_space<vmem>>, vector<8x16xbf16>
    %14 = arith.extui %4 : vector<16x128xi1> to vector<16x128xi32>
    %15 = arith.sitofp %14 : vector<16x128xi32> to vector<16x128xf32>
    %16 = arith.truncf %15 : vector<16x128xf32> to vector<16x128xbf16>
    %cst_13 = arith.constant dense<0.000000e+00> : vector<8x128xf32>
    %17 = tpu.matmul %13, %16, %cst_13 {dimension_numbers = #tpu.dot_dimension_numbers<[1], [0], [0], [1], [0, 0, 1, 1], [], []>} : vector<8x16xbf16>, vector<16x128xbf16>, vector<8x128xf32> -> vector<8x128xf32>
    %18 = arith.addf %12, %17 : vector<8x128xf32>
    %c0_14 = arith.constant 0 : index
    %c0_15 = arith.constant 0 : index
    %19 = vector.load %arg11[%c0_14, %c0_15] : memref<8x128xf32, #tpu.memory_space<vmem>>, vector<8x128xf32>
    tpu.vector_store %arg11[%c0_14, %c0_15], %18 {strides = array<i32>} : memref<8x128xf32, #tpu.memory_space<vmem>>, vector<8x128xf32>,
    %c0_i32_16 = arith.constant 0 : i32
    %20 = arith.cmpi eq, %arg2, %c0_i32_16 : i32
    %21 = arith.extui %20 : i1 to i32
    %c0_i32_17 = arith.constant 0 : i32
    %22 = arith.cmpi ne, %21, %c0_i32_17 : i32
    scf.if %22 {
      %c0_18 = arith.constant 0 : index
      %c0_19 = arith.constant 0 : index
      %23 = vector.load %arg10[%c0_18, %c0_19] : memref<8x128xf32, #tpu.memory_space<vmem>>, vector<8x128xf32>
      %c0_20 = arith.constant 0 : index
      %c0_21 = arith.constant 0 : index
      %24 = vector.load %arg8[%c0_20, %c0_21] : memref<1x128xf32, #tpu.memory_space<vmem>>, vector<1x128xf32>
      %25 = vector.broadcast %24 : vector<1x128xf32> to vector<8x128xf32>
      %26 = arith.mulf %23, %25 : vector<8x128xf32>
      %c0_22 = arith.constant 0 : index
      %c0_23 = arith.constant 0 : index
      %27 = vector.load %arg6[%c0_22, %c0_23] : memref<8x1xf32, #tpu.memory_space<vmem>>, vector<8x1xf32>
      %c0_24 = arith.constant 0 : index
      %c0_25 = arith.constant 0 : index
      %28 = vector.load %arg7[%c0_24, %c0_25] : memref<1x128xf32, #tpu.memory_space<vmem>>, vector<1x128xf32>
      %29 = vector.broadcast %27 : vector<8x1xf32> to vector<8x128xf32>
      %30 = vector.broadcast %28 : vector<1x128xf32> to vector<8x128xf32>
      %31 = arith.mulf %29, %30 : vector<8x128xf32>
      %32 = arith.subf %26, %31 : vector<8x128xf32>
      %c0_26 = arith.constant 0 : index
      %c0_27 = arith.constant 0 : index
      %33 = vector.load %arg11[%c0_26, %c0_27] : memref<8x128xf32, #tpu.memory_space<vmem>>, vector<8x128xf32>
      %cst_28 = arith.constant 0.000000e+00 : f32
      %34 = vector.broadcast %cst_28 : f32 to vector<8x128xf32>
      %35 = arith.cmpf ogt, %33, %34 : vector<8x128xf32>
      %cst_29 = arith.constant 0.000000e+00 : f32
      %36 = vector.broadcast %cst_29 : f32 to vector<8x128xf32>
      %37 = arith.select %35, %36, %32 : vector<8x128xi1>, vector<8x128xf32>
      %c0_30 = arith.constant 0 : index
      %c0_31 = arith.constant 0 : index
      %38 = vector.load %arg9[%c0_30, %c0_31] : memref<8x128xf32, #tpu.memory_space<vmem>>, vector<8x128xf32>
      tpu.vector_store %arg9[%c0_30, %c0_31], %37 {strides = array<i32>} : memref<8x128xf32, #tpu.memory_space<vmem>>, vector<8x128xf32>,
    } else {
    }
    return
  }
  func.func @transform_0(%arg0: i32, %arg1: i32, %arg2: i32) -> (i32, i32) {
    %c0_i32 = arith.constant 0 : i32
    return %arg2, %arg1 : i32, i32
  }
  func.func @transform_1(%arg0: i32, %arg1: i32, %arg2: i32) -> (i32, i32) {
    %c0_i32 = arith.constant 0 : i32
    return %arg0, %arg2 : i32, i32
  }
  func.func @transform_2(%arg0: i32, %arg1: i32, %arg2: i32) -> (i32, i32) {
    %c0_i32 = arith.constant 0 : i32
    return %arg0, %arg2 : i32, i32
  }
  func.func @transform_3(%arg0: i32, %arg1: i32, %arg2: i32) -> (i32, i32) {
    %c0_i32 = arith.constant 0 : i32
    %c0_i32_0 = arith.constant 0 : i32
    return %arg0, %c0_i32 : i32, i32
  }
  func.func @transform_4(%arg0: i32, %arg1: i32, %arg2: i32) -> (i32, i32) {
    %c0_i32 = arith.constant 0 : i32
    %c0_i32_0 = arith.constant 0 : i32
    return %c0_i32, %arg1 : i32, i32
  }
  func.func @transform_5(%arg0: i32, %arg1: i32, %arg2: i32) -> (i32, i32) {
    %c0_i32 = arith.constant 0 : i32
    %c0_i32_0 = arith.constant 0 : i32
    return %c0_i32, %arg1 : i32, i32
  }
  func.func @transform_6(%arg0: i32, %arg1: i32, %arg2: i32) -> (i32, i32) {
    %c0_i32 = arith.constant 0 : i32
    return %arg0, %arg1 : i32, i32
  }
}

</mosaic_0001>

<llo_original>
// kernel: fn.1
$region0: #{fn.1}
  #allocation0 [shape = 'u32[]', space=smem, size = 0x4, offset = 0x4, fixed_abs, tag = 'smem constant byte address 0x4 - core index']
  #allocation1 [shape = 'u32[144,128]{1,0:T(1,128)}', space=vmem, size = 0x12000, scoped, tag = 'internal scratch']
  #allocation2 [shape = 'f32[8,128]{1,0:T(8,128)}', space=vmem, size = 0x1000, scoped, tag = 'scratch operand']
  #allocation3 [shape = 'f32[8,128]{1,0:T(8,128)}', space=vmem, size = 0x1000, scoped, tag = 'scratch operand']
  %s0 = inlined_call_operand.vmem [shape: f32[16,128], index: 0, kind: input, shape index: {}]
  %s1 = inlined_call_operand.vmem [shape: f32[8,16], index: 1, kind: input, shape index: {}]
  %s2 = inlined_call_operand.vmem [shape: bf16[8,16], index: 2, kind: input, shape index: {}]
  %s3 = inlined_call_operand.vmem [shape: f32[8,1], index: 3, kind: input, shape index: {}]
  %s4 = inlined_call_operand.vmem [shape: f32[1,128], index: 4, kind: input, shape index: {}]
  %s5 = inlined_call_operand.vmem [shape: f32[1,128], index: 5, kind: input, shape index: {}]
  %s6 = inlined_call_operand.vmem [shape: f32[8,128], index: 6, kind: output, shape index: {}]
  %s7 = sld [smem:[#allocation0]]
  $region42: #{fn.1} parent=0
    _
  %s9 = ssub.s32 1, %s7
  %s10 = scalar_select 0, %s9, %s7
  // Predicated region
  $region2: #{fn.1} parent=0 // pred_check
    _
  $region3: #{fn.1} parent=0 // pred_check_branch
    %12 = sbr.rel (0) target = $region5
  $region4: #{fn.1} parent=0 // pred_region
    _
  $region5: #{fn.1} parent=0 // pred_fallthru
    _
  // Predicated region
  $region6: #{fn.1} parent=0 // pred_check
    _
  $region7: #{fn.1} parent=0 // pred_check_branch
    %14 = sbr.rel (0) target = $region9
  $region8: #{fn.1} parent=0 // pred_region
    _
  $region9: #{fn.1} parent=0 // pred_fallthru
    _
  // Predicated region
  $region10: #{fn.1} parent=0 // pred_check
    _
  $region11: #{fn.1} parent=0 // pred_check_branch
    %16 = sbr.rel (0) target = $region13
  $region12: #{fn.1} parent=0 // pred_region
    _
  $region13: #{fn.1} parent=0 // pred_fallthru
    _
  // Predicated region
  $region14: #{fn.1} parent=0 // pred_check
    _
  $region15: #{fn.1} parent=0 // pred_check_branch
    %18 = sbr.rel (0) target = $region17
  $region16: #{fn.1} parent=0 // pred_region
    _
  $region17: #{fn.1} parent=0 // pred_fallthru
    _
  // Predicated region
  $region18: #{fn.1} parent=0 // pred_check
    _
  $region19: #{fn.1} parent=0 // pred_check_branch
    %20 = sbr.rel (0) target = $region21
  $region20: #{fn.1} parent=0 // pred_region
    _
  $region21: #{fn.1} parent=0 // pred_fallthru
    _
  // Predicated region
  $region22: #{fn.1} parent=0 // pred_check
    _
  $region23: #{fn.1} parent=0 // pred_check_branch
    %22 = sbr.rel (0) target = $region25
  $region24: #{fn.1} parent=0 // pred_region
    _
  $region25: #{fn.1} parent=0 // pred_fallthru
    _
  %p24 = scmp.eq.s32.totalorder 0, 0
  // Predicated region
  $region26: #{fn.1} parent=0 // pred_check
    %p25 = pneg %p24
  $region27: #{fn.1} parent=0 // pred_check_branch
    %27 = sbr.rel (%p25) target = $region29
  $region28: #{fn.1} parent=0 // pred_region
    %28 = vst [vmem:[#allocation2] sm:$0xff] 0.0
    %29 = vst [vmem:[#allocation3] sm:$0xff] 0.0
  $region29: #{fn.1} parent=0 // pred_fallthru
    _
  %v30 = vld [vmem:[%s0] sm:$0xff]
  %v31 = vld [vmem:[%s0 + $0x8] sm:$0xff]
  %vm32 = vcmp.ne.f32.partialorder %v30, %v30
  %vm33 = vcmp.ne.f32.partialorder %v31, %v31
  %v34 = vsel %vm32, 0.0, %v30
  %v35 = vsel %vm33, 0.0, %v31
  %v36 = vld [vmem:[#allocation2] sm:$0xff]
  %v37 = vld [vmem:[%s1] sm:$0xff]
  %vm38 = vcmask 130048
  %v40 = vsel %vm38, %v37, 0
  %42 = vmatprep.subr.mxu0 0.0
  %43 = vmatpush1.msra.mxu0 0.0
  %44 = vmatprep.subr.mxu0 0.0
  %45 = vmatpush1.msra.mxu0 0.0
  %46 = vmatprep.subr.mxu0 0.0
  %47 = vmatpush1.msra.mxu0 0.0
  %48 = vmatprep.subr.mxu0 0.0
  %49 = vmatpush1.msra.mxu0 0.0
  %50 = vmatprep.subr.mxu0 0.0
  %51 = vmatpush1.msra.mxu0 0.0
  %52 = vmatprep.subr.mxu0 0.0
  %53 = vmatpush1.msra.mxu0 0.0
  %54 = vmatprep.subr.mxu0 0.0
  %55 = vmatpush1.msra.mxu0 0.0
  %56 = vmatprep.subr.mxu0 0.0
  %57 = vmatpush1.msra.mxu0 0.0
  %58 = vmatprep.subr.mxu0 0.0
  %59 = vmatpush1.msra.mxu0 0.0
  %60 = vmatprep.subr.mxu0 0.0
  %61 = vmatpush1.msra.mxu0 0.0
  %62 = vmatprep.subr.mxu0 0.0
  %63 = vmatpush1.msra.mxu0 0.0
  %64 = vmatprep.subr.mxu0 0.0
  %65 = vmatpush1.msra.mxu0 0.0
  %66 = vmatprep.subr.mxu0 0.0
  %67 = vmatpush1.msra.mxu0 0.0
  %68 = vmatprep.subr.mxu0 0.0
  %69 = vmatpush1.msra.mxu0 0.0
  %70 = vmatprep.subr.mxu0 0.0
  %71 = vmatpush1.msra.mxu0 %v35
  %72 = vmatprep.subr.mxu0 0.0
  %73 = vmatpush1.msra.mxu0 %v34
  %74 = vmatprep.subr.mxu0 0.0
  %75 = vmatpush2.msra.mxu0 0.0
  %76 = vmatprep.subr.mxu0 0.0
  %77 = vmatpush2.msra.mxu0 0.0
  %78 = vmatprep.subr.mxu0 0.0
  %79 = vmatpush2.msra.mxu0 0.0
  %80 = vmatprep.subr.mxu0 0.0
  %81 = vmatpush2.msra.mxu0 0.0
  %82 = vmatprep.subr.mxu0 0.0
  %83 = vmatpush2.msra.mxu0 0.0
  %84 = vmatprep.subr.mxu0 0.0
  %85 = vmatpush2.msra.mxu0 0.0
  %86 = vmatprep.subr.mxu0 0.0
  %87 = vmatpush2.msra.mxu0 0.0
  %88 = vmatprep.subr.mxu0 0.0
  %89 = vmatpush2.msra.mxu0 0.0
  %90 = vmatprep.subr.mxu0 0.0
  %91 = vmatpush2.msra.mxu0 0.0
  %92 = vmatprep.subr.mxu0 0.0
  %93 = vmatpush2.msra.mxu0 0.0
  %94 = vmatprep.subr.mxu0 0.0
  %95 = vmatpush2.msra.mxu0 0.0
  %96 = vmatprep.subr.mxu0 0.0
  %97 = vmatpush2.msra.mxu0 0.0
  %98 = vmatprep.subr.mxu0 0.0
  %99 = vmatpush2.msra.mxu0 0.0
  %100 = vmatprep.subr.mxu0 0.0
  %101 = vmatpush2.msra.mxu0 0.0
  %102 = vmatprep.subr.mxu0 0.0
  %103 = vmatpush2.msra.mxu0 0.0
  %104 = vmatprep.subr.mxu0 0.0
  %105 = vmatpush2.msra.mxu0 0.0
  %106 = vmatprep.mubr.f32.mxu0 0.0
  %107 = vmatmul.mubr.f32.gmra.mxu0 %v40
  %v108 = vpop.f32.mrf.mxu0
  %v109 = vadd.f32 0.0, %v108
  %v110 = vpop.f32.mrf.mxu0
  %111 = vdwg.mxu0
  %v112 = vadd.f32 %v36, %v109
  %113 = vst [vmem:[#allocation2] sm:$0xff] %v112
  %v114 = vld [vmem:[#allocation3] sm:$0xff]
  %v115 = vld [vmem:[%s2] sm:$0xf]
  %v116 = vsel %vm32, 1, 0
  %v117 = vsel %vm33, 1, 0
  %v118 = vcvt.s32.f32 %v116
  %v119 = vcvt.s32.f32 %v117
  %v120 = vpack.c.bf16 %v119, %v118
  %v122 = vsel %vm38, %v115, 0
  %124 = vmatprep.subr.bf16.mxu0 0
  %125 = vmatpush1.bf16.msra.mxu0 0
  %126 = vmatprep.subr.bf16.mxu0 0
  %127 = vmatpush1.bf16.msra.mxu0 0
  %128 = vmatprep.subr.bf16.mxu0 0
  %129 = vmatpush1.bf16.msra.mxu0 0
  %130 = vmatprep.subr.bf16.mxu0 0
  %131 = vmatpush1.bf16.msra.mxu0 0
  %132 = vmatprep.subr.bf16.mxu0 0
  %133 = vmatpush1.bf16.msra.mxu0 0
  %134 = vmatprep.subr.bf16.mxu0 0
  %135 = vmatpush1.bf16.msra.mxu0 0
  %136 = vmatprep.subr.bf16.mxu0 0
  %137 = vmatpush1.bf16.msra.mxu0 0
  %138 = vmatprep.subr.bf16.mxu0 0
  %139 = vmatpush1.bf16.msra.mxu0 %v120
  %140 = vmatprep.subr.bf16.mxu0 0
  %141 = vmatpush2.bf16.msra.mxu0 0
  %142 = vmatprep.subr.bf16.mxu0 0
  %143 = vmatpush2.bf16.msra.mxu0 0
  %144 = vmatprep.subr.bf16.mxu0 0
  %145 = vmatpush2.bf16.msra.mxu0 0
  %146 = vmatprep.subr.bf16.mxu0 0
  %147 = vmatpush2.bf16.msra.mxu0 0
  %148 = vmatprep.subr.bf16.mxu0 0
  %149 = vmatpush2.bf16.msra.mxu0 0
  %150 = vmatprep.subr.bf16.mxu0 0
  %151 = vmatpush2.bf16.msra.mxu0 0
  %152 = vmatprep.subr.bf16.mxu0 0
  %153 = vmatpush2.bf16.msra.mxu0 0
  %154 = vmatprep.subr.bf16.mxu0 0
  %155 = vmatpush2.bf16.msra.mxu0 0
  %156 = vmatprep.mubr.bf16.mxu0 0
  %157 = vmatmul.mubr.bf16.gmra.mxu0 %v122
  %v158 = vpop.f32.mrf.mxu0
  %v159 = vadd.f32 0.0, %v158
  %v160 = vpop.f32.mrf.mxu0
  %v161 = vpop.f32.mrf.mxu0
  %v162 = vpop.f32.mrf.mxu0
  %163 = vdwg.mxu0
  %v164 = vadd.f32 %v114, %v159
  %165 = vst [vmem:[#allocation3] sm:$0xff] %v164
  // Predicated region
  $region30: #{fn.1} parent=0 // pred_check
    %p166 = pneg %p24
  $region31: #{fn.1} parent=0 // pred_check_branch
    %168 = sbr.rel (%p166) target = $region33
  $region32: #{fn.1} parent=0 // pred_region
    %v169 = vld [vmem:[#allocation2] sm:$0xff]
    %v170 = vld [vmem:[%s5] sm:$0x1]
    %v172 = vlaneseq
    %v173 = vshrl.u32 %v172, 7
    %v174 = vsub.s32 0, %v173
    %v175 = vrot.slane %v170, %v174
    %v177 = vmul.f32 %v169, %v175
    %v178 = vld [vmem:[%s3] sm:$0xff]
    %v179 = vld [vmem:[%s4] sm:$0x1]
    %181 = vset.pattern.permute.xlu0 0
    %182 = vperm.xlu0 %181, %v178
    %v183 = vpop.permute.xlu0 %182
    %v186 = vlaneseq
    %v187 = vshrl.u32 %v186, 7
    %v188 = vsub.s32 0, %v187
    %v189 = vrot.slane %v179, %v188
    %v191 = vmul.f32 %v183, %v189
    %v192 = vsub.f32 %v177, %v191
    %v193 = vld [vmem:[#allocation3] sm:$0xff]
    %vm194 = vcmp.gt.f32.partialorder %v193, 0.0
    %v195 = vsel %vm194, 0.0, %v192
    %196 = vst [vmem:[%s6] sm:$0xff] %v195
  $region33: #{fn.1} parent=0 // pred_fallthru
    _
  // Predicated region
  $region34: #{fn.1} parent=0 // pred_check
    _
  $region35: #{fn.1} parent=0 // pred_check_branch
    %198 = sbr.rel (0) target = $region37
  $region36: #{fn.1} parent=0 // pred_region
    _
  $region37: #{fn.1} parent=0 // pred_fallthru
    _
  // Predicated region
  $region38: #{fn.1} parent=0 // pred_check
    _
  $region39: #{fn.1} parent=0 // pred_check_branch
    %200 = sbr.rel (0) target = $region41
  $region40: #{fn.1} parent=0 // pred_region
    _
  $region41: #{fn.1} parent=0 // pred_fallthru
    _

</llo_original>
